<compile_context>
chip_gen: v5e
topology: v5e:2x2
jax: 0.10.0
libtpu: 0.0.40
codegen_flags: <defaults>
</compile_context>

<pallas_src>
import jax
import jax.numpy as jnp
from jax.experimental import pallas as pl
from jax.experimental.pallas import tpu as pltpu


def _round_up(n: int, m: int) -> int:
    return ((n + m - 1) // m) * m


def _pad_to(a, shape):
    pads = [(0, s - d) for d, s in zip(a.shape, shape)]
    return jnp.pad(a, pads)


def _default_tm() -> int:
    """MXU-matched batch tile: 128 on v5e (4x128x128 MXU), 256 on v6e/v7x."""
    try:
        kind = jax.devices()[0].device_kind.lower()
    except Exception:
        return 256
    for tag in ("v5 lite", "v5e", "v5lite", "v4", "v3", "v2"):
        if tag in kind:
            return 128
    return 256


# ---------------------------------------------------------------------------
# Kernel: full MLP for one batch tile, weights resident in VMEM.
# ---------------------------------------------------------------------------
def mlp_kernel(x_ref, w1_ref, b1_ref, w2_ref, b2_ref, w3_ref, b3_ref, o_ref):
    # fc1 + ReLU  (bf16 operands on the MXU, f32 accumulation; bias/ReLU f32 on VPU)
    h1 = jnp.dot(x_ref[...], w1_ref[...], preferred_element_type=jnp.float32)
    h1 = jnp.maximum(h1 + b1_ref[...], 0.0)
    # fc2 + ReLU
    h2 = jnp.dot(h1.astype(jnp.bfloat16), w2_ref[...],
                 preferred_element_type=jnp.float32)
    h2 = jnp.maximum(h2 + b2_ref[...], 0.0)
    # fc3 (no activation)
    out = jnp.dot(h2.astype(jnp.bfloat16), w3_ref[...],
                  preferred_element_type=jnp.float32)
    o_ref[...] = (out + b3_ref[...]).astype(o_ref.dtype)


# ---------------------------------------------------------------------------
# Parameter prep (done ONCE, outside the forward path): pad feature dims to
# multiples of 128 and cast MXU operands to bf16; biases stay f32.
# ---------------------------------------------------------------------------
def prepare_params(params):
    w1, b1, w2, b2, w3, b3 = (
        params["w1"], params["b1"], params["w2"],
        params["b2"], params["w3"], params["b3"],
    )
    IN, H = w1.shape
    C = w3.shape[1]
    IN_p = _round_up(IN, 128)
    H_p = _round_up(H, 128)
    C_p = _round_up(C, 128)
    return {
        "w1": _pad_to(w1, (IN_p, H_p)).astype(jnp.bfloat16),
        "w2": _pad_to(w2, (H_p, H_p)).astype(jnp.bfloat16),
        "w3": _pad_to(w3, (H_p, C_p)).astype(jnp.bfloat16),
        "b1": _pad_to(b1, (1, H_p)).astype(jnp.float32),
        "b2": _pad_to(b2, (1, H_p)).astype(jnp.float32),
        "b3": _pad_to(b3, (1, C_p)).astype(jnp.float32),
        "dims": (IN, H, C, IN_p, H_p, C_p),
    }


def neural_network_forward(x, prepared, *, tm=None):
    """x: (B, input_size) f32.  prepared: output of prepare_params()."""
    IN, H, C, IN_p, H_p, C_p = prepared["dims"]
    w1_p, b1_p = prepared["w1"], prepared["b1"]
    w2_p, b2_p = prepared["w2"], prepared["b2"]
    w3_p, b3_p = prepared["w3"], prepared["b3"]

    B = x.shape[0]
    if tm is None:
        tm = _default_tm()
    # bf16 packs 16 rows per vreg; keep the batch tile a multiple of 16.
    TM = min(tm, _round_up(B, 16))
    B_p = _round_up(B, TM)
    grid_m = B_p // TM

    # Only the activation is padded/cast per call.
    x_p = _pad_to(x, (B_p, IN_p)).astype(jnp.bfloat16)

    # Resident (constant index_map, single-buffered) specs for weights/biases.
    def resident(arr):
        nd = arr.ndim
        return pl.BlockSpec(arr.shape, lambda i, _nd=nd: (0,) * _nd,
                            pipeline_mode=pl.Buffered(buffer_count=1))

    # VMEM budget from actual block footprint (+ headroom).
    weight_bytes = (w1_p.size + w2_p.size + w3_p.size) * 2          # bf16, single-buffered
    bias_bytes = (b1_p.size + b2_p.size + b3_p.size) * 4            # f32
    x_tile_bytes = 2 * TM * IN_p * 2                                 # double-buffered bf16
    out_tile_bytes = 2 * TM * C_p * 4                                # double-buffered f32
    inter_bytes = 2 * TM * H_p * 4                                   # f32 h1/h2 intermediates
    vmem_limit = int(1.25 * (weight_bytes + bias_bytes + x_tile_bytes
                             + out_tile_bytes + inter_bytes)) + (1 << 20)
    vmem_limit = min(max(vmem_limit, 4 << 20), 64 << 20)

    flops = 2 * B * (IN * H + H * H + H * C)
    bytes_accessed = (x_p.size * 2 + weight_bytes + bias_bytes + B_p * C_p * 4)
    cost = pl.CostEstimate(flops=flops, transcendentals=0,
                           bytes_accessed=bytes_accessed)

    out_p = pl.pallas_call(
        mlp_kernel,
        out_shape=jax.ShapeDtypeStruct((B_p, C_p), jnp.float32),
        grid_spec=pltpu.PrefetchScalarGridSpec(
            num_scalar_prefetch=0,
            grid=(grid_m,),
            in_specs=[
                pl.BlockSpec((TM, IN_p), lambda i: (i, 0)),   # x: batch-tiled
                resident(w1_p), resident(b1_p),
                resident(w2_p), resident(b2_p),
                resident(w3_p), resident(b3_p),
            ],
            out_specs=pl.BlockSpec((TM, C_p), lambda i: (i, 0)),
        ),
        compiler_params=pltpu.CompilerParams(
            dimension_semantics=("parallel",),
            vmem_limit_bytes=vmem_limit,
        ),
        cost_estimate=cost,
    )(x_p, w1_p, b1_p, w2_p, b2_p, w3_p, b3_p)

    # Slice away batch / class padding.
    return out_p[:B, :C]


def init_params(key, input_size, hidden_size, num_classes):
    """Deterministic init mimicking nn.Linear's uniform(-1/sqrt(fan_in), +) scheme.
    Weights stored as (in_features, out_features) — already transposed."""
    ks = jax.random.split(key, 6)

    def linear(kw, kb, fan_in, fan_out):
        bound = 1.0 / jnp.sqrt(fan_in)
        w = jax.random.uniform(kw, (fan_in, fan_out), jnp.float32, -bound, bound)
        b = jax.random.uniform(kb, (1, fan_out), jnp.float32, -bound, bound)
        return w, b

    w1, b1 = linear(ks[0], ks[1], input_size, hidden_size)
    w2, b2 = linear(ks[2], ks[3], hidden_size, hidden_size)
    w3, b3 = linear(ks[4], ks[5], hidden_size, num_classes)
    return {"w1": w1, "b1": b1, "w2": w2, "b2": b2, "w3": w3, "b3": b3}


if __name__ == "__main__":
    # NOTE: at these toy sizes the kernel is overhead-bound by construction;
    # the tiling/padding/budgeting above is what makes it scale to real sizes.
    input_size, hidden_size, num_classes = 32, 64, 16
    batch = 8

    key = jax.random.PRNGKey(0)
    k_x, k_p = jax.random.split(key)
    x = jax.random.normal(k_x, (batch, input_size), jnp.float32)
    params = init_params(k_p, input_size, hidden_size, num_classes)

    prepared = prepare_params(params)            # one-time weight prep
    out = neural_network_forward(x, prepared)
    out = jax.block_until_ready(out)

    # Pure-JAX reference mirroring the kernel's bf16-operand / f32-accumulation math.
    bf = lambda a: a.astype(jnp.bfloat16)
    h = jnp.maximum(
        jnp.dot(bf(x), bf(params["w1"]), preferred_element_type=jnp.float32)
        + params["b1"], 0.0)
    h = jnp.maximum(
        jnp.dot(bf(h), bf(params["w2"]), preferred_element_type=jnp.float32)
        + params["b2"], 0.0)
    ref = (jnp.dot(bf(h), bf(params["w3"]), preferred_element_type=jnp.float32)
           + params["b3"])

    assert out.shape == (batch, num_classes)
    assert jnp.allclose(out, ref, atol=1e-2, rtol=1e-2)

    print("KERNEL_OK")
</pallas_src>

<mosaic_0001>
module attributes {stable_mosaic.version = 11 : i64} {
  func.func @mlp_kernel(%arg0: i32, %arg1: memref<16x128xbf16, #tpu.memory_space<vmem>>, %arg2: memref<128x128xbf16, #tpu.memory_space<vmem>>, %arg3: memref<1x128xf32, #tpu.memory_space<vmem>>, %arg4: memref<128x128xbf16, #tpu.memory_space<vmem>>, %arg5: memref<1x128xf32, #tpu.memory_space<vmem>>, %arg6: memref<128x128xbf16, #tpu.memory_space<vmem>>, %arg7: memref<1x128xf32, #tpu.memory_space<vmem>>, %arg8: memref<16x128xf32, #tpu.memory_space<vmem>>) attributes {dimension_semantics = [#tpu.dimension_semantics<parallel>], iteration_bounds = array<i64: 1>, scalar_prefetch = 0 : i64, scratch_operands = 0 : i64, tpu.core_type = #tpu.core_type<tc>, window_params = [{transform_indices = @transform_0, window_bounds = array<i64: 16, 128>}, {pipeline_mode = #tpu.pipeline_mode<synchronous>, transform_indices = @transform_1, window_bounds = array<i64: 128, 128>}, {pipeline_mode = #tpu.pipeline_mode<synchronous>, transform_indices = @transform_2, window_bounds = array<i64: 1, 128>}, {pipeline_mode = #tpu.pipeline_mode<synchronous>, transform_indices = @transform_3, window_bounds = array<i64: 128, 128>}, {pipeline_mode = #tpu.pipeline_mode<synchronous>, transform_indices = @transform_4, window_bounds = array<i64: 1, 128>}, {pipeline_mode = #tpu.pipeline_mode<synchronous>, transform_indices = @transform_5, window_bounds = array<i64: 128, 128>}, {pipeline_mode = #tpu.pipeline_mode<synchronous>, transform_indices = @transform_6, window_bounds = array<i64: 1, 128>}, {transform_indices = @transform_7, window_bounds = array<i64: 16, 128>}]} {
    %c0 = arith.constant 0 : index
    %c0_0 = arith.constant 0 : index
    %0 = vector.load %arg1[%c0, %c0_0] : memref<16x128xbf16, #tpu.memory_space<vmem>>, vector<16x128xbf16>
    %c0_1 = arith.constant 0 : index
    %c0_2 = arith.constant 0 : index
    %1 = vector.load %arg2[%c0_1, %c0_2] : memref<128x128xbf16, #tpu.memory_space<vmem>>, vector<128x128xbf16>
    %cst = arith.constant dense<0.000000e+00> : vector<16x128xf32>
    %2 = tpu.matmul %0, %1, %cst {dimension_numbers = #tpu.dot_dimension_numbers<[1], [0], [0], [1], [0, 0, 1, 1], [], []>} : vector<16x128xbf16>, vector<128x128xbf16>, vector<16x128xf32> -> vector<16x128xf32>
    %c0_3 = arith.constant 0 : index
    %c0_4 = arith.constant 0 : index
    %3 = vector.load %arg3[%c0_3, %c0_4] : memref<1x128xf32, #tpu.memory_space<vmem>>, vector<1x128xf32>
    %4 = vector.broadcast %3 : vector<1x128xf32> to vector<16x128xf32>
    %5 = arith.addf %2, %4 : vector<16x128xf32>
    %cst_5 = arith.constant 0.000000e+00 : f32
    %6 = vector.broadcast %cst_5 : f32 to vector<16x128xf32>
    %7 = arith.maximumf %5, %6 : vector<16x128xf32>
    %8 = arith.truncf %7 : vector<16x128xf32> to vector<16x128xbf16>
    %c0_6 = arith.constant 0 : index
    %c0_7 = arith.constant 0 : index
    %9 = vector.load %arg4[%c0_6, %c0_7] : memref<128x128xbf16, #tpu.memory_space<vmem>>, vector<128x128xbf16>
    %cst_8 = arith.constant dense<0.000000e+00> : vector<16x128xf32>
    %10 = tpu.matmul %8, %9, %cst_8 {dimension_numbers = #tpu.dot_dimension_numbers<[1], [0], [0], [1], [0, 0, 1, 1], [], []>} : vector<16x128xbf16>, vector<128x128xbf16>, vector<16x128xf32> -> vector<16x128xf32>
    %c0_9 = arith.constant 0 : index
    %c0_10 = arith.constant 0 : index
    %11 = vector.load %arg5[%c0_9, %c0_10] : memref<1x128xf32, #tpu.memory_space<vmem>>, vector<1x128xf32>
    %12 = vector.broadcast %11 : vector<1x128xf32> to vector<16x128xf32>
    %13 = arith.addf %10, %12 : vector<16x128xf32>
    %cst_11 = arith.constant 0.000000e+00 : f32
    %14 = vector.broadcast %cst_11 : f32 to vector<16x128xf32>
    %15 = arith.maximumf %13, %14 : vector<16x128xf32>
    %16 = arith.truncf %15 : vector<16x128xf32> to vector<16x128xbf16>
    %c0_12 = arith.constant 0 : index
    %c0_13 = arith.constant 0 : index
    %17 = vector.load %arg6[%c0_12, %c0_13] : memref<128x128xbf16, #tpu.memory_space<vmem>>, vector<128x128xbf16>
    %cst_14 = arith.constant dense<0.000000e+00> : vector<16x128xf32>
    %18 = tpu.matmul %16, %17, %cst_14 {dimension_numbers = #tpu.dot_dimension_numbers<[1], [0], [0], [1], [0, 0, 1, 1], [], []>} : vector<16x128xbf16>, vector<128x128xbf16>, vector<16x128xf32> -> vector<16x128xf32>
    %c0_15 = arith.constant 0 : index
    %c0_16 = arith.constant 0 : index
    %19 = vector.load %arg7[%c0_15, %c0_16] : memref<1x128xf32, #tpu.memory_space<vmem>>, vector<1x128xf32>
    %20 = vector.broadcast %19 : vector<1x128xf32> to vector<16x128xf32>
    %21 = arith.addf %18, %20 : vector<16x128xf32>
    %c0_17 = arith.constant 0 : index
    %c0_18 = arith.constant 0 : index
    %22 = vector.load %arg8[%c0_17, %c0_18] : memref<16x128xf32, #tpu.memory_space<vmem>>, vector<16x128xf32>
    tpu.vector_store %arg8[%c0_17, %c0_18], %21 {strides = array<i32>} : memref<16x128xf32, #tpu.memory_space<vmem>>, vector<16x128xf32>,
    return
  }
  func.func @transform_0(%arg0: i32) -> (i32, i32) {
    %c0_i32 = arith.constant 0 : i32
    %c0_i32_0 = arith.constant 0 : i32
    return %arg0, %c0_i32 : i32, i32
  }
  func.func @transform_1(%arg0: i32) -> (i32, i32) {
    %c0_i32 = arith.constant 0 : i32
    %c0_i32_0 = arith.constant 0 : i32
    %c0_i32_1 = arith.constant 0 : i32
    return %c0_i32, %c0_i32_0 : i32, i32
  }
  func.func @transform_2(%arg0: i32) -> (i32, i32) {
    %c0_i32 = arith.constant 0 : i32
    %c0_i32_0 = arith.constant 0 : i32
    %c0_i32_1 = arith.constant 0 : i32
    return %c0_i32, %c0_i32_0 : i32, i32
  }
  func.func @transform_3(%arg0: i32) -> (i32, i32) {
    %c0_i32 = arith.constant 0 : i32
    %c0_i32_0 = arith.constant 0 : i32
    %c0_i32_1 = arith.constant 0 : i32
    return %c0_i32, %c0_i32_0 : i32, i32
  }
  func.func @transform_4(%arg0: i32) -> (i32, i32) {
    %c0_i32 = arith.constant 0 : i32
    %c0_i32_0 = arith.constant 0 : i32
    %c0_i32_1 = arith.constant 0 : i32
    return %c0_i32, %c0_i32_0 : i32, i32
  }
  func.func @transform_5(%arg0: i32) -> (i32, i32) {
    %c0_i32 = arith.constant 0 : i32
    %c0_i32_0 = arith.constant 0 : i32
    %c0_i32_1 = arith.constant 0 : i32
    return %c0_i32, %c0_i32_0 : i32, i32
  }
  func.func @transform_6(%arg0: i32) -> (i32, i32) {
    %c0_i32 = arith.constant 0 : i32
    %c0_i32_0 = arith.constant 0 : i32
    %c0_i32_1 = arith.constant 0 : i32
    return %c0_i32, %c0_i32_0 : i32, i32
  }
  func.func @transform_7(%arg0: i32) -> (i32, i32) {
    %c0_i32 = arith.constant 0 : i32
    %c0_i32_0 = arith.constant 0 : i32
    return %arg0, %c0_i32 : i32, i32
  }
}

</mosaic_0001>

<llo_original>
// kernel: tpu_custom_call.1
$region0: #{tpu_custom_call.1}
  #allocation0 [shape = 'u32[]', space=smem, size = 0x4, offset = 0x4, fixed_abs, tag = 'smem constant byte address 0x4 - core index']
  #allocation1 [shape = 'u32[72,128]{1,0:T(1,128)}', space=vmem, size = 0x9000, scoped, tag = 'internal scratch']
  %s0 = inlined_call_operand.hbm [shape: bf16[16,128], index: 0, kind: input, shape index: {}]
  %s1 = inlined_call_operand.hbm [shape: bf16[128,128], index: 1, kind: input, shape index: {}]
  %s2 = inlined_call_operand.vmem [shape: f32[1,128], index: 2, kind: input, shape index: {}]
  %s3 = inlined_call_operand.hbm [shape: bf16[128,128], index: 3, kind: input, shape index: {}]
  %s4 = inlined_call_operand.vmem [shape: f32[1,128], index: 4, kind: input, shape index: {}]
  %s5 = inlined_call_operand.hbm [shape: bf16[128,128], index: 5, kind: input, shape index: {}]
  %s6 = inlined_call_operand.vmem [shape: f32[1,128], index: 6, kind: input, shape index: {}]
  %s7 = inlined_call_operand.hbm [shape: f32[16,128], index: 7, kind: output, shape index: {}]
  %s8 = sld [smem:[#allocation0]]
  $region54: #{tpu_custom_call.1} parent=0
    _
  %s10 = ssub.s32 1, %s8
  %s11 = scalar_select 0, %s10, %s8
  $region1: #{tpu_custom_call.1} parent=0
    #allocation2 [shape = 'u8[4096]{0}', space=vmem, size = 0x1000, scoped, tag = 'input window, operand 0, single buffered']
    #allocation3 [shape = 's32[1]{0}', space=sflag, size = 0x4, scoped, tag = 'scoped memory for tpu_custom_call.1']
    #allocation4 [shape = 's32[1]{0}', space=sflag, size = 0x4, scoped, tag = 'scoped memory for tpu_custom_call.1']
    #allocation5 [shape = 'u8[32768]{0}', space=vmem, size = 0x8000, scoped, tag = 'input window, operand 1, single buffered']
    #allocation6 [shape = 's32[1]{0}', space=sflag, size = 0x4, scoped, tag = 'scoped memory for tpu_custom_call.1']
    #allocation7 [shape = 'u8[32768]{0}', space=vmem, size = 0x8000, scoped, tag = 'input window, operand 3, single buffered']
    #allocation8 [shape = 'u8[32768]{0}', space=vmem, size = 0x8000, scoped, tag = 'input window, operand 5, single buffered']
    #allocation9 [shape = 's32[1]{0}', space=sflag, size = 0x4, scoped, tag = 'scoped memory for tpu_custom_call.1']
    #allocation10 [shape = 'u8[8192]{0}', space=vmem, size = 0x2000, scoped, tag = 'output window, operand 0, single buffered']
    %12 = vsyncpa [#allocation3], 0
    %13 = vsyncpa [#allocation6], 0
    %14 = vsyncpa [#allocation9], 0
    %15 = vsyncpa [#allocation4], 0
    // Predicated region
    $region2: #{tpu_custom_call.1} parent=1 // pred_check
      _
    $region3: #{tpu_custom_call.1} parent=1 // pred_check_branch
      %17 = sbr.rel (0) target = $region5
    $region4: #{tpu_custom_call.1} parent=1 // pred_region
      %19 = vsyncadd [#allocation3], 0
      %s20 = sshll.u32 %s0, 4
      %s21 = int_to_ptr.hbm [resolvable:$true] %s20
      %s22 = sshll.u32 [#allocation2], 4
      %s23 = int_to_ptr.vmem [resolvable:$true] %s22
      %28 = dma.hbm_to_vmem [thread:$0]  %s21, 128, %s23, [#allocation3], 64, 64, 4
    $region5: #{tpu_custom_call.1} parent=1 // pred_fallthru
      _
    // Predicated region
    $region6: #{tpu_custom_call.1} parent=1 // pred_check
      _
    $region7: #{tpu_custom_call.1} parent=1 // pred_check_branch
      %30 = sbr.rel (0) target = $region9
    $region8: #{tpu_custom_call.1} parent=1 // pred_region
      %32 = vsyncadd [#allocation6], 0
      %s33 = sshll.u32 %s1, 4
      %s34 = int_to_ptr.hbm [resolvable:$true] %s33
      %s35 = sshll.u32 [#allocation5], 4
      %s36 = int_to_ptr.vmem [resolvable:$true] %s35
      %41 = dma.hbm_to_vmem [thread:$0]  %s34, 1024, %s36, [#allocation6], 64, 64, 4
    $region9: #{tpu_custom_call.1} parent=1 // pred_fallthru
      _
    // Predicated region
    $region10: #{tpu_custom_call.1} parent=1 // pred_check
      _
    $region11: #{tpu_custom_call.1} parent=1 // pred_check_branch
      %43 = sbr.rel (0) target = $region13
    $region12: #{tpu_custom_call.1} parent=1 // pred_region
      _
    $region13: #{tpu_custom_call.1} parent=1 // pred_fallthru
      _
    // Predicated region
    $region14: #{tpu_custom_call.1} parent=1 // pred_check
      _
    $region15: #{tpu_custom_call.1} parent=1 // pred_check_branch
      %45 = sbr.rel (0) target = $region17
    $region16: #{tpu_custom_call.1} parent=1 // pred_region
      %47 = vsyncadd [#allocation6], 0
      %s48 = sshll.u32 %s3, 4
      %s49 = int_to_ptr.hbm [resolvable:$true] %s48
      %s50 = sshll.u32 [#allocation7], 4
      %s51 = int_to_ptr.vmem [resolvable:$true] %s50
      %56 = dma.hbm_to_vmem [thread:$0]  %s49, 1024, %s51, [#allocation6], 64, 64, 4
    $region17: #{tpu_custom_call.1} parent=1 // pred_fallthru
      _
    // Predicated region
    $region18: #{tpu_custom_call.1} parent=1 // pred_check
      _
    $region19: #{tpu_custom_call.1} parent=1 // pred_check_branch
      %58 = sbr.rel (0) target = $region21
    $region20: #{tpu_custom_call.1} parent=1 // pred_region
      _
    $region21: #{tpu_custom_call.1} parent=1 // pred_fallthru
      _
    // Predicated region
    $region22: #{tpu_custom_call.1} parent=1 // pred_check
      _
    $region23: #{tpu_custom_call.1} parent=1 // pred_check_branch
      %60 = sbr.rel (0) target = $region25
    $region24: #{tpu_custom_call.1} parent=1 // pred_region
      %62 = vsyncadd [#allocation9], 0
      %s63 = sshll.u32 %s5, 4
      %s64 = int_to_ptr.hbm [resolvable:$true] %s63
      %s65 = sshll.u32 [#allocation8], 4
      %s66 = int_to_ptr.vmem [resolvable:$true] %s65
      %71 = dma.hbm_to_vmem [thread:$0]  %s64, 1024, %s66, [#allocation9], 64, 64, 4
    $region25: #{tpu_custom_call.1} parent=1 // pred_fallthru
      _
    // Predicated region
    $region26: #{tpu_custom_call.1} parent=1 // pred_check
      _
    $region27: #{tpu_custom_call.1} parent=1 // pred_check_branch
      %73 = sbr.rel (0) target = $region29
    $region28: #{tpu_custom_call.1} parent=1 // pred_region
      _
    $region29: #{tpu_custom_call.1} parent=1 // pred_fallthru
      _
    // Predicated region
    $region30: #{tpu_custom_call.1} parent=1 // pred_check
      _
    $region31: #{tpu_custom_call.1} parent=1 // pred_check_branch
      %75 = sbr.rel (0) target = $region33
    $region32: #{tpu_custom_call.1} parent=1 // pred_region
      %77 = dma.done [#allocation3], 128
    $region33: #{tpu_custom_call.1} parent=1 // pred_fallthru
      _
    // Predicated region
    $region34: #{tpu_custom_call.1} parent=1 // pred_check
      _
    $region35: #{tpu_custom_call.1} parent=1 // pred_check_branch
      %79 = sbr.rel (0) target = $region37
    $region36: #{tpu_custom_call.1} parent=1 // pred_region
      %81 = dma.done [#allocation6], 1024
    $region37: #{tpu_custom_call.1} parent=1 // pred_fallthru
      _
    // Predicated region
    $region38: #{tpu_custom_call.1} parent=1 // pred_check
      _
    $region39: #{tpu_custom_call.1} parent=1 // pred_check_branch
      %83 = sbr.rel (0) target = $region41
    $region40: #{tpu_custom_call.1} parent=1 // pred_region
      %85 = dma.done [#allocation6], 1024
    $region41: #{tpu_custom_call.1} parent=1 // pred_fallthru
      _
    // Predicated region
    $region42: #{tpu_custom_call.1} parent=1 // pred_check
      _
    $region43: #{tpu_custom_call.1} parent=1 // pred_check_branch
      %87 = sbr.rel (0) target = $region45
    $region44: #{tpu_custom_call.1} parent=1 // pred_region
      %89 = dma.done [#allocation9], 1024
    $region45: #{tpu_custom_call.1} parent=1 // pred_fallthru
      _
    %v90 = vld [vmem:[#allocation2] sm:$0xf]
    %v91 = vld [vmem:[#allocation2 + $0x4] sm:$0xf]
    %v92 = vld [vmem:[#allocation5] sm:$0xf]
    %v93 = vld [vmem:[#allocation5 + $0x4] sm:$0xf]
    %v94 = vld [vmem:[#allocation5 + $0x8] sm:$0xf]
    %v95 = vld [vmem:[#allocation5 + $0xc] sm:$0xf]
    %v96 = vld [vmem:[#allocation5 + $0x10] sm:$0xf]
    %v97 = vld [vmem:[#allocation5 + $0x14] sm:$0xf]
    %v98 = vld [vmem:[#allocation5 + $0x18] sm:$0xf]
    %v99 = vld [vmem:[#allocation5 + $0x1c] sm:$0xf]
    %v100 = vld [vmem:[#allocation5 + $0x20] sm:$0xf]
    %v101 = vld [vmem:[#allocation5 + $0x24] sm:$0xf]
    %v102 = vld [vmem:[#allocation5 + $0x28] sm:$0xf]
    %v103 = vld [vmem:[#allocation5 + $0x2c] sm:$0xf]
    %v104 = vld [vmem:[#allocation5 + $0x30] sm:$0xf]
    %v105 = vld [vmem:[#allocation5 + $0x34] sm:$0xf]
    %v106 = vld [vmem:[#allocation5 + $0x38] sm:$0xf]
    %v107 = vld [vmem:[#allocation5 + $0x3c] sm:$0xf]
    %v108 = vld [vmem:[%s2] sm:$0x1]
    %v110 = vperm.slane %v108, 0
    %v114 = vunpack.c.l.b16 %v90
    %v115 = vunpack.c.l.b16 %v91
    %v116 = vpack.c.b16 %v115, %v114
    %v134 = vunpack.c.l.b16 %v92
    %v135 = vunpack.c.l.b16 %v93
    %v136 = vunpack.c.l.b16 %v94
    %v137 = vunpack.c.l.b16 %v95
    %v138 = vunpack.c.l.b16 %v96
    %v139 = vunpack.c.l.b16 %v97
    %v140 = vunpack.c.l.b16 %v98
    %v141 = vunpack.c.l.b16 %v99
    %v142 = vunpack.c.l.b16 %v100
    %v143 = vunpack.c.l.b16 %v101
    %v144 = vunpack.c.l.b16 %v102
    %v145 = vunpack.c.l.b16 %v103
    %v146 = vunpack.c.l.b16 %v104
    %v147 = vunpack.c.l.b16 %v105
    %v148 = vunpack.c.l.b16 %v106
    %v149 = vunpack.c.l.b16 %v107
    %v150 = vpack.c.b16 %v135, %v134
    %v151 = vpack.c.b16 %v137, %v136
    %v152 = vpack.c.b16 %v139, %v138
    %v153 = vpack.c.b16 %v141, %v140
    %v154 = vpack.c.b16 %v143, %v142
    %v155 = vpack.c.b16 %v145, %v144
    %v156 = vpack.c.b16 %v147, %v146
    %v157 = vpack.c.b16 %v149, %v148
    %166 = vmatpush.bf16.msra.mxu0 %v157
    %167 = vmatpush.bf16.msra.mxu0 %v156
    %168 = vmatpush.bf16.msra.mxu0 %v155
    %169 = vmatpush.bf16.msra.mxu0 %v154
    %170 = vmatpush.bf16.msra.mxu0 %v153
    %171 = vmatpush.bf16.msra.mxu0 %v152
    %172 = vmatpush.bf16.msra.mxu0 %v151
    %173 = vmatpush.bf16.msra.mxu0 %v150
    %174 = vmatmul.bf16.gmra.mxu0 %v116
    %v175 = vpop.f32.mrf.mxu0
    %v176 = vadd.f32 %v110, %v175
    %v177 = vpop.f32.mrf.mxu0
    %v178 = vadd.f32 %v110, %v177
    %179 = vdwg.mxu0
    %v180 = vmax.f32 %v176, 0.0
    %v181 = vmax.f32 %v178, 0.0
    %v182 = vpack.c.bf16 %v181, %v180
    %v183 = vld [vmem:[#allocation7] sm:$0xf]
    %v184 = vld [vmem:[#allocation7 + $0x4] sm:$0xf]
    %v185 = vld [vmem:[#allocation7 + $0x8] sm:$0xf]
    %v186 = vld [vmem:[#allocation7 + $0xc] sm:$0xf]
    %v187 = vld [vmem:[#allocation7 + $0x10] sm:$0xf]
    %v188 = vld [vmem:[#allocation7 + $0x14] sm:$0xf]
    %v189 = vld [vmem:[#allocation7 + $0x18] sm:$0xf]
    %v190 = vld [vmem:[#allocation7 + $0x1c] sm:$0xf]
    %v191 = vld [vmem:[#allocation7 + $0x20] sm:$0xf]
    %v192 = vld [vmem:[#allocation7 + $0x24] sm:$0xf]
    %v193 = vld [vmem:[#allocation7 + $0x28] sm:$0xf]
    %v194 = vld [vmem:[#allocation7 + $0x2c] sm:$0xf]
    %v195 = vld [vmem:[#allocation7 + $0x30] sm:$0xf]
    %v196 = vld [vmem:[#allocation7 + $0x34] sm:$0xf]
    %v197 = vld [vmem:[#allocation7 + $0x38] sm:$0xf]
    %v198 = vld [vmem:[#allocation7 + $0x3c] sm:$0xf]
    %v199 = vld [vmem:[%s4] sm:$0x1]
    %v201 = vperm.slane %v199, 0
    %v219 = vunpack.c.l.b16 %v183
    %v220 = vunpack.c.l.b16 %v184
    %v221 = vunpack.c.l.b16 %v185
    %v222 = vunpack.c.l.b16 %v186
    %v223 = vunpack.c.l.b16 %v187
    %v224 = vunpack.c.l.b16 %v188
    %v225 = vunpack.c.l.b16 %v189
    %v226 = vunpack.c.l.b16 %v190
    %v227 = vunpack.c.l.b16 %v191
    %v228 = vunpack.c.l.b16 %v192
    %v229 = vunpack.c.l.b16 %v193
    %v230 = vunpack.c.l.b16 %v194
    %v231 = vunpack.c.l.b16 %v195
    %v232 = vunpack.c.l.b16 %v196
    %v233 = vunpack.c.l.b16 %v197
    %v234 = vunpack.c.l.b16 %v198
    %v235 = vpack.c.b16 %v220, %v219
    %v236 = vpack.c.b16 %v222, %v221
    %v237 = vpack.c.b16 %v224, %v223
    %v238 = vpack.c.b16 %v226, %v225
    %v239 = vpack.c.b16 %v228, %v227
    %v240 = vpack.c.b16 %v230, %v229
    %v241 = vpack.c.b16 %v232, %v231
    %v242 = vpack.c.b16 %v234, %v233
    %251 = vmatpush.bf16.msra.mxu0 %v242
    %252 = vmatpush.bf16.msra.mxu0 %v241
    %253 = vmatpush.bf16.msra.mxu0 %v240
    %254 = vmatpush.bf16.msra.mxu0 %v239
    %255 = vmatpush.bf16.msra.mxu0 %v238
    %256 = vmatpush.bf16.msra.mxu0 %v237
    %257 = vmatpush.bf16.msra.mxu0 %v236
    %258 = vmatpush.bf16.msra.mxu0 %v235
    %259 = vmatmul.bf16.gmra.mxu0 %v182
    %v260 = vpop.f32.mrf.mxu0
    %v261 = vadd.f32 %v201, %v260
    %v262 = vpop.f32.mrf.mxu0
    %v263 = vadd.f32 %v201, %v262
    %264 = vdwg.mxu0
    %v265 = vmax.f32 %v261, 0.0
    %v266 = vmax.f32 %v263, 0.0
    %v267 = vpack.c.bf16 %v266, %v265
    %v268 = vld [vmem:[#allocation8] sm:$0xf]
    %v269 = vld [vmem:[#allocation8 + $0x4] sm:$0xf]
    %v270 = vld [vmem:[#allocation8 + $0x8] sm:$0xf]
    %v271 = vld [vmem:[#allocation8 + $0xc] sm:$0xf]
    %v272 = vld [vmem:[#allocation8 + $0x10] sm:$0xf]
    %v273 = vld [vmem:[#allocation8 + $0x14] sm:$0xf]
    %v274 = vld [vmem:[#allocation8 + $0x18] sm:$0xf]
    %v275 = vld [vmem:[#allocation8 + $0x1c] sm:$0xf]
    %v276 = vld [vmem:[#allocation8 + $0x20] sm:$0xf]
    %v277 = vld [vmem:[#allocation8 + $0x24] sm:$0xf]
    %v278 = vld [vmem:[#allocation8 + $0x28] sm:$0xf]
    %v279 = vld [vmem:[#allocation8 + $0x2c] sm:$0xf]
    %v280 = vld [vmem:[#allocation8 + $0x30] sm:$0xf]
    %v281 = vld [vmem:[#allocation8 + $0x34] sm:$0xf]
    %v282 = vld [vmem:[#allocation8 + $0x38] sm:$0xf]
    %v283 = vld [vmem:[#allocation8 + $0x3c] sm:$0xf]
    %v284 = vld [vmem:[%s6] sm:$0x1]
    %v286 = vperm.slane %v284, 0
    %v304 = vunpack.c.l.b16 %v268
    %v305 = vunpack.c.l.b16 %v269
    %v306 = vunpack.c.l.b16 %v270
    %v307 = vunpack.c.l.b16 %v271
    %v308 = vunpack.c.l.b16 %v272
    %v309 = vunpack.c.l.b16 %v273
    %v310 = vunpack.c.l.b16 %v274
    %v311 = vunpack.c.l.b16 %v275
    %v312 = vunpack.c.l.b16 %v276
    %v313 = vunpack.c.l.b16 %v277
    %v314 = vunpack.c.l.b16 %v278
    %v315 = vunpack.c.l.b16 %v279
    %v316 = vunpack.c.l.b16 %v280
    %v317 = vunpack.c.l.b16 %v281
    %v318 = vunpack.c.l.b16 %v282
    %v319 = vunpack.c.l.b16 %v283
    %v320 = vpack.c.b16 %v305, %v304
    %v321 = vpack.c.b16 %v307, %v306
    %v322 = vpack.c.b16 %v309, %v308
    %v323 = vpack.c.b16 %v311, %v310
    %v324 = vpack.c.b16 %v313, %v312
    %v325 = vpack.c.b16 %v315, %v314
    %v326 = vpack.c.b16 %v317, %v316
    %v327 = vpack.c.b16 %v319, %v318
    %336 = vmatpush.bf16.msra.mxu0 %v327
    %337 = vmatpush.bf16.msra.mxu0 %v326
    %338 = vmatpush.bf16.msra.mxu0 %v325
    %339 = vmatpush.bf16.msra.mxu0 %v324
    %340 = vmatpush.bf16.msra.mxu0 %v323
    %341 = vmatpush.bf16.msra.mxu0 %v322
    %342 = vmatpush.bf16.msra.mxu0 %v321
    %343 = vmatpush.bf16.msra.mxu0 %v320
    %344 = vmatmul.bf16.gmra.mxu0 %v267
    %v345 = vpop.f32.mrf.mxu0
    %v346 = vadd.f32 %v286, %v345
    %v347 = vpop.f32.mrf.mxu0
    %v348 = vadd.f32 %v286, %v347
    %349 = vdwg.mxu0
    %350 = vst [vmem:[#allocation10] sm:$0xff] %v346
    %351 = vst [vmem:[#allocation10 + $0x8] sm:$0xff] %v348
    // Predicated region
    $region46: #{tpu_custom_call.1} parent=1 // pred_check
      _
    $region47: #{tpu_custom_call.1} parent=1 // pred_check_branch
      %353 = sbr.rel (0) target = $region49
    $region48: #{tpu_custom_call.1} parent=1 // pred_region
      %355 = vsyncadd [#allocation4], 0
      %s356 = sshll.u32 [#allocation10], 4
      %s357 = int_to_ptr.vmem [resolvable:$true] %s356
      %s358 = sshll.u32 %s7, 4
      %s359 = int_to_ptr.hbm [resolvable:$true] %s358
      %364 = dma.vmem_to_hbm [thread:$0]  %s357, 256, %s359, [#allocation4], 128, 128, 8
    $region49: #{tpu_custom_call.1} parent=1 // pred_fallthru
      _
    // Predicated region
    $region50: #{tpu_custom_call.1} parent=1 // pred_check
      _
    $region51: #{tpu_custom_call.1} parent=1 // pred_check_branch
      %366 = sbr.rel (0) target = $region53
    $region52: #{tpu_custom_call.1} parent=1 // pred_region
      %368 = dma.done [#allocation4], 256
    $region53: #{tpu_custom_call.1} parent=1 // pred_fallthru
      _
    %369 = vsyncpa [#allocation3], 1
    %370 = vsyncpa [#allocation6], 1
    %371 = vsyncpa [#allocation9], 1
    %372 = vsyncpa [#allocation4], 1

</llo_original>
